<compile_context>
chip_gen: v7x
topology: tpu7x:2x2x1
jax: 0.10.0
libtpu: 0.0.40
codegen_flags: <defaults>
</compile_context>

<pallas_src>
import math

import jax
import jax.numpy as jnp
from jax.experimental import pallas as pl
from jax.experimental.pallas import tpu as pltpu


# ---------------------------------------------------------------------------
# Stage 1: support = X @ W   (row-tiled, computed once, bf16 output)
# ---------------------------------------------------------------------------
def _support_kernel(x_ref, w_ref, out_ref):
    # Cast to bf16 in-kernel (VPU) -> MXU matmul with f32 accumulation.
    out_ref[...] = jnp.dot(
        x_ref[...].astype(jnp.bfloat16),
        w_ref[...].astype(jnp.bfloat16),
        preferred_element_type=jnp.float32,
    ).astype(out_ref.dtype)


def _compute_support(x, w, *, tm1):
    n, in_f = x.shape
    out_f = w.shape[1]
    return pl.pallas_call(
        _support_kernel,
        out_shape=jax.ShapeDtypeStruct((n, out_f), jnp.bfloat16),
        grid_spec=pltpu.PrefetchScalarGridSpec(
            num_scalar_prefetch=0,
            grid=(n // tm1,),
            in_specs=[
                pl.BlockSpec((tm1, in_f), lambda i: (i, 0)),     # X row tile
                pl.BlockSpec((in_f, out_f), lambda i: (0, 0)),   # full weight
            ],
            out_specs=pl.BlockSpec((tm1, out_f), lambda i: (i, 0)),
        ),
        compiler_params=pltpu.CompilerParams(
            dimension_semantics=("parallel",)),
        cost_estimate=pl.CostEstimate(
            flops=2 * n * in_f * out_f,
            transcendentals=0,
            bytes_accessed=4 * n * in_f + 4 * in_f * out_f + 2 * n * out_f,
        ),
    )(x, w)


# ---------------------------------------------------------------------------
# Stage 2: output = adj @ support + bias   (row tiles x contraction tiles)
# ---------------------------------------------------------------------------
def _make_aggregate_kernel(tk, support_resident):
    def kernel(adj_ref, sup_ref, b_ref, out_ref):
        k = pl.program_id(1)

        # Output block index is (i, 0): VMEM-resident across the k axis, so
        # accumulate directly into it. Seed with the broadcast bias at k == 0.
        @pl.when(k == 0)
        def _init():
            out_ref[...] = jnp.zeros_like(out_ref) + b_ref[...]

        # Cast adj in-kernel: adj is read from HBM exactly once as f32.
        adj_tile = adj_ref[...].astype(jnp.bfloat16)
        if support_resident:
            start = pl.multiple_of(k * tk, tk)
            sup_tile = sup_ref[pl.ds(start, tk), :]
        else:
            sup_tile = sup_ref[...]

        out_ref[...] += jnp.dot(
            adj_tile, sup_tile, preferred_element_type=jnp.float32)

    return kernel


def _largest_tile(n, cap, min_blocks=1):
    """Largest power-of-two multiple of 128 that divides n, <= cap, keeping
    at least `min_blocks` blocks (n is assumed to be a multiple of 128)."""
    t = 128
    while (t * 2 <= cap) and (n % (t * 2) == 0) and (n // (t * 2) >= min_blocks):
        t *= 2
    return t


def graph_convolution(x, weight, adj, bias=None):
    """Fused GCN layer: adj @ (x @ weight) + bias  (f32 output).

    Accuracy contract: MXU inputs are bf16 (support itself is stored in bf16),
    all accumulation is f32. Expect ~1e-2-level agreement vs a full-f32 ref
    for row-normalized adjacencies.
    """
    n, in_f = x.shape
    out_f = weight.shape[1]
    if bias is None:
        bias = jnp.zeros((out_f,), jnp.float32)

    # Pad N to a multiple of 128 (keeps lane-dense 128-wide blocks); zero
    # rows/cols contribute nothing, padded output rows are sliced off.
    n_pad = (-n) % 128
    if n_pad:
        x = jnp.pad(x, ((0, n_pad), (0, 0)))
        adj = jnp.pad(adj, ((0, n_pad), (0, n_pad)))
    npad = n + n_pad

    # Tile selection.
    tm1 = _largest_tile(npad, 1024)                 # stage-1 row tile
    tm = _largest_tile(npad, 512, min_blocks=2)     # stage-2 row tile (keep >=2
                                                    # row blocks for megacore)
    tk = _largest_tile(npad, 256)                   # stage-2 contraction tile

    # Stage 1: support (computed once, kept in bf16 for the second matmul).
    support = _compute_support(x, weight, tm1=tm1)

    nbi, nbk = npad // tm, npad // tk

    # Keep support fully VMEM-resident when it comfortably fits (eliminates
    # the nbi-fold re-read); otherwise stream it tiled along k.
    support_bytes = npad * out_f * 2  # bf16
    support_resident = 2 * support_bytes <= 8 * 1024 * 1024
    if support_resident:
        sup_spec = pl.BlockSpec((npad, out_f), lambda i, k: (0, 0))
        sup_vmem = 2 * support_bytes
    else:
        sup_spec = pl.BlockSpec((tk, out_f), lambda i, k: (k, 0))
        sup_vmem = 2 * tk * out_f * 2

    bias2d = bias.reshape(1, out_f).astype(jnp.float32)

    # VMEM budget from the actual footprint (double-buffered), with headroom,
    # capped well under v7x's 64 MiB per-core physical VMEM.
    footprint = (
        2 * tm * tk * 4          # adj tile (f32, double-buffered)
        + sup_vmem               # support
        + 2 * tm * out_f * 4     # output tile (f32)
        + 2 * out_f * 4          # bias
    )
    vmem_limit = int(min(max(2 * footprint, 32 * 1024 * 1024),
                         48 * 1024 * 1024))

    out = pl.pallas_call(
        _make_aggregate_kernel(tk, support_resident),
        out_shape=jax.ShapeDtypeStruct((npad, out_f), jnp.float32),
        grid_spec=pltpu.PrefetchScalarGridSpec(
            num_scalar_prefetch=0,
            grid=(nbi, nbk),
            in_specs=[
                pl.BlockSpec((tm, tk), lambda i, k: (i, k)),     # adj tile (f32)
                sup_spec,                                        # support (bf16)
                pl.BlockSpec((1, out_f), lambda i, k: (0, 0)),   # bias (f32)
            ],
            out_specs=pl.BlockSpec((tm, out_f), lambda i, k: (i, 0)),
        ),
        compiler_params=pltpu.CompilerParams(
            dimension_semantics=("parallel", "arbitrary"),
            vmem_limit_bytes=vmem_limit,
        ),
        cost_estimate=pl.CostEstimate(
            flops=2 * npad * npad * out_f,
            transcendentals=0,
            bytes_accessed=(4 * npad * npad + 2 * npad * out_f
                            + 4 * npad * out_f + 4 * out_f),
        ),
    )(adj, support, bias2d)

    return out[:n] if n_pad else out


def reference(x, weight, adj, bias):
    return adj @ (x @ weight) + bias[None, :]


if __name__ == "__main__":
    # Small shapes consistent with the module: N nodes, in_features -> out_features.
    N = 256
    in_features = 64
    out_features = 128

    key = jax.random.PRNGKey(0)
    k_x, k_adj, k_w, k_b = jax.random.split(key, 4)

    # Node features and a dense (row-normalized) adjacency matrix.
    x = jax.random.normal(k_x, (N, in_features), dtype=jnp.float32)
    adj_raw = (jax.random.uniform(k_adj, (N, N)) < 0.1).astype(jnp.float32)
    adj_raw = adj_raw + jnp.eye(N, dtype=jnp.float32)        # add self-loops
    adj = adj_raw / jnp.sum(adj_raw, axis=1, keepdims=True)  # row-normalize

    # Deterministic parameter init mirroring reset_parameters():
    #   stdv = 1 / sqrt(out_features); uniform(-stdv, stdv)
    stdv = 1.0 / math.sqrt(out_features)
    weight = jax.random.uniform(
        k_w, (in_features, out_features), minval=-stdv, maxval=stdv,
        dtype=jnp.float32)
    bias = jax.random.uniform(
        k_b, (out_features,), minval=-stdv, maxval=stdv, dtype=jnp.float32)

    out = graph_convolution(x, weight, adj, bias)
    out = jax.block_until_ready(out)

    ref = reference(x, weight, adj, bias)
    assert out.shape == (N, out_features)
    # bf16 MXU inputs with f32 accumulation -> ~1e-2-level agreement vs f32 ref.
    assert jnp.allclose(out, ref, atol=2e-2, rtol=2e-2), (
        float(jnp.max(jnp.abs(out - ref))))

    print("KERNEL_OK")
</pallas_src>

<mosaic_0001>
module attributes {stable_mosaic.version = 11 : i64} {
  func.func @_support_kernel(%arg0: i32, %arg1: memref<256x64xf32, #tpu.memory_space<vmem>>, %arg2: memref<64x128xf32, #tpu.memory_space<vmem>>, %arg3: memref<256x128xbf16, #tpu.memory_space<vmem>>) attributes {dimension_semantics = [#tpu.dimension_semantics<parallel>], iteration_bounds = array<i64: 1>, scalar_prefetch = 0 : i64, scratch_operands = 0 : i64, tpu.core_type = #tpu.core_type<tc>, window_params = [{transform_indices = @transform_0, window_bounds = array<i64: 256, 64>}, {pipeline_mode = #tpu.pipeline_mode<synchronous>, transform_indices = @transform_1, window_bounds = array<i64: 64, 128>}, {transform_indices = @transform_2, window_bounds = array<i64: 256, 128>}]} {
    %c0 = arith.constant 0 : index
    %c0_0 = arith.constant 0 : index
    %0 = vector.load %arg1[%c0, %c0_0] : memref<256x64xf32, #tpu.memory_space<vmem>>, vector<256x64xf32>
    %1 = arith.truncf %0 : vector<256x64xf32> to vector<256x64xbf16>
    %c0_1 = arith.constant 0 : index
    %c0_2 = arith.constant 0 : index
    %2 = vector.load %arg2[%c0_1, %c0_2] : memref<64x128xf32, #tpu.memory_space<vmem>>, vector<64x128xf32>
    %3 = arith.truncf %2 : vector<64x128xf32> to vector<64x128xbf16>
    %cst = arith.constant dense<0.000000e+00> : vector<256x128xf32>
    %4 = tpu.matmul %1, %3, %cst {dimension_numbers = #tpu.dot_dimension_numbers<[1], [0], [0], [1], [0, 0, 1, 1], [], []>} : vector<256x64xbf16>, vector<64x128xbf16>, vector<256x128xf32> -> vector<256x128xf32>
    %5 = arith.truncf %4 : vector<256x128xf32> to vector<256x128xbf16>
    %c0_3 = arith.constant 0 : index
    %c0_4 = arith.constant 0 : index
    %6 = vector.load %arg3[%c0_3, %c0_4] : memref<256x128xbf16, #tpu.memory_space<vmem>>, vector<256x128xbf16>
    tpu.vector_store %arg3[%c0_3, %c0_4], %5 {strides = array<i32>} : memref<256x128xbf16, #tpu.memory_space<vmem>>, vector<256x128xbf16>,
    return
  }
  func.func @transform_0(%arg0: i32) -> (i32, i32) {
    %c0_i32 = arith.constant 0 : i32
    %c0_i32_0 = arith.constant 0 : i32
    return %arg0, %c0_i32 : i32, i32
  }
  func.func @transform_1(%arg0: i32) -> (i32, i32) {
    %c0_i32 = arith.constant 0 : i32
    %c0_i32_0 = arith.constant 0 : i32
    %c0_i32_1 = arith.constant 0 : i32
    return %c0_i32, %c0_i32_0 : i32, i32
  }
  func.func @transform_2(%arg0: i32) -> (i32, i32) {
    %c0_i32 = arith.constant 0 : i32
    %c0_i32_0 = arith.constant 0 : i32
    return %arg0, %c0_i32 : i32, i32
  }
}

</mosaic_0001>

<llo_original>
// kernel: tpu_custom_call.1
$region0: #{tpu_custom_call.1}
  #allocation0 [shape = 'u32[]', space=smem, size = 0x4, offset = 0x4, fixed_abs, tag = 'smem constant byte address 0x4 - core index']
  #allocation1 [shape = 'u32[144,128]{1,0:T(1,128)}', space=vmem, size = 0x12000, scoped, tag = 'internal scratch']
  %s0 = inlined_call_operand.vmem [shape: f32[256,64], index: 0, kind: input, shape index: {}]
  %s1 = inlined_call_operand.vmem [shape: f32[64,128], index: 1, kind: input, shape index: {}]
  %s2 = inlined_call_operand.hbm [shape: bf16[256,128], index: 2, kind: output, shape index: {}]
  %s3 = sld [smem:[#allocation0]]
  $region18: #{tpu_custom_call.1} parent=0
    _
  %s5 = ssub.s32 1, %s3
  %s6 = scalar_select 0, %s5, %s3
  $region1: #{tpu_custom_call.1} parent=0
    #allocation2 [shape = 'u8[65536]{0}', space=vmem, size = 0x10000, scoped, tag = 'output window, operand 0, single buffered']
    #allocation3 [shape = 's32[1]{0}', space=sflag, size = 0x4, scoped, tag = 'scoped memory for tpu_custom_call.1']
    %7 = vsyncpa [#allocation3], 0
    // Predicated region
    $region2: #{tpu_custom_call.1} parent=1 // pred_check
      _
    $region3: #{tpu_custom_call.1} parent=1 // pred_check_branch
      %9 = sbr.rel (0) target = $region5
    $region4: #{tpu_custom_call.1} parent=1 // pred_region
      _
    $region5: #{tpu_custom_call.1} parent=1 // pred_fallthru
      _
    // Predicated region
    $region6: #{tpu_custom_call.1} parent=1 // pred_check
      _
    $region7: #{tpu_custom_call.1} parent=1 // pred_check_branch
      %11 = sbr.rel (0) target = $region9
    $region8: #{tpu_custom_call.1} parent=1 // pred_region
      _
    $region9: #{tpu_custom_call.1} parent=1 // pred_fallthru
      _
    %v13 = vld [vmem:[%s0] sm:$0xff]
    %v14 = vld [vmem:[%s0 + $0x8] sm:$0xff]
    %v15 = vld [vmem:[%s0 + $0x10] sm:$0xff]
    %v16 = vld [vmem:[%s0 + $0x18] sm:$0xff]
    %v17 = vld [vmem:[%s0 + $0x20] sm:$0xff]
    %v18 = vld [vmem:[%s0 + $0x28] sm:$0xff]
    %v19 = vld [vmem:[%s0 + $0x30] sm:$0xff]
    %v20 = vld [vmem:[%s0 + $0x38] sm:$0xff]
    %v21 = vld [vmem:[%s0 + $0x40] sm:$0xff]
    %v22 = vld [vmem:[%s0 + $0x48] sm:$0xff]
    %v23 = vld [vmem:[%s0 + $0x50] sm:$0xff]
    %v24 = vld [vmem:[%s0 + $0x58] sm:$0xff]
    %v25 = vld [vmem:[%s0 + $0x60] sm:$0xff]
    %v26 = vld [vmem:[%s0 + $0x68] sm:$0xff]
    %v27 = vld [vmem:[%s0 + $0x70] sm:$0xff]
    %v28 = vld [vmem:[%s0 + $0x78] sm:$0xff]
    %v29 = vld [vmem:[%s0 + $0x80] sm:$0xff]
    %v30 = vld [vmem:[%s0 + $0x88] sm:$0xff]
    %v31 = vld [vmem:[%s0 + $0x90] sm:$0xff]
    %v32 = vld [vmem:[%s0 + $0x98] sm:$0xff]
    %v33 = vld [vmem:[%s0 + $0xa0] sm:$0xff]
    %v34 = vld [vmem:[%s0 + $0xa8] sm:$0xff]
    %v35 = vld [vmem:[%s0 + $0xb0] sm:$0xff]
    %v36 = vld [vmem:[%s0 + $0xb8] sm:$0xff]
    %v37 = vld [vmem:[%s0 + $0xc0] sm:$0xff]
    %v38 = vld [vmem:[%s0 + $0xc8] sm:$0xff]
    %v39 = vld [vmem:[%s0 + $0xd0] sm:$0xff]
    %v40 = vld [vmem:[%s0 + $0xd8] sm:$0xff]
    %v41 = vld [vmem:[%s0 + $0xe0] sm:$0xff]
    %v42 = vld [vmem:[%s0 + $0xe8] sm:$0xff]
    %v43 = vld [vmem:[%s0 + $0xf0] sm:$0xff]
    %v44 = vld [vmem:[%s0 + $0xf8] sm:$0xff]
    %v45 = vpack.c.bf16 %v14, %v13
    %v46 = vpack.c.bf16 %v16, %v15
    %v47 = vpack.c.bf16 %v18, %v17
    %v48 = vpack.c.bf16 %v20, %v19
    %v49 = vpack.c.bf16 %v22, %v21
    %v50 = vpack.c.bf16 %v24, %v23
    %v51 = vpack.c.bf16 %v26, %v25
    %v52 = vpack.c.bf16 %v28, %v27
    %v53 = vpack.c.bf16 %v30, %v29
    %v54 = vpack.c.bf16 %v32, %v31
    %v55 = vpack.c.bf16 %v34, %v33
    %v56 = vpack.c.bf16 %v36, %v35
    %v57 = vpack.c.bf16 %v38, %v37
    %v58 = vpack.c.bf16 %v40, %v39
    %v59 = vpack.c.bf16 %v42, %v41
    %v60 = vpack.c.bf16 %v44, %v43
    %v61 = vld [vmem:[%s1] sm:$0xff]
    %v62 = vld [vmem:[%s1 + $0x8] sm:$0xff]
    %v63 = vld [vmem:[%s1 + $0x10] sm:$0xff]
    %v64 = vld [vmem:[%s1 + $0x18] sm:$0xff]
    %v65 = vld [vmem:[%s1 + $0x20] sm:$0xff]
    %v66 = vld [vmem:[%s1 + $0x28] sm:$0xff]
    %v67 = vld [vmem:[%s1 + $0x30] sm:$0xff]
    %v68 = vld [vmem:[%s1 + $0x38] sm:$0xff]
    %v69 = vpack.c.bf16 %v62, %v61
    %v70 = vpack.c.bf16 %v64, %v63
    %v71 = vpack.c.bf16 %v66, %v65
    %v72 = vpack.c.bf16 %v68, %v67
    %vm73 = vcmask 523264
    %v75 = vsel %vm73, %v45, 0
    %v78 = vsel %vm73, %v46, 0
    %v81 = vsel %vm73, %v47, 0
    %v84 = vsel %vm73, %v48, 0
    %v87 = vsel %vm73, %v49, 0
    %v90 = vsel %vm73, %v50, 0
    %v93 = vsel %vm73, %v51, 0
    %v96 = vsel %vm73, %v52, 0
    %v99 = vsel %vm73, %v53, 0
    %v102 = vsel %vm73, %v54, 0
    %v105 = vsel %vm73, %v55, 0
    %v108 = vsel %vm73, %v56, 0
    %v111 = vsel %vm73, %v57, 0
    %v114 = vsel %vm73, %v58, 0
    %v117 = vsel %vm73, %v59, 0
    %v120 = vsel %vm73, %v60, 0
    %122 = vmatprep.subr.bf16.mxu0 0
    %123 = vmatpush1.bf16.msra.mxu0 %v69
    %124 = vmatprep.subr.bf16.mxu0 0
    %125 = vmatpush1.bf16.msra.mxu0 %v70
    %126 = vmatprep.subr.bf16.mxu0 0
    %127 = vmatpush1.bf16.msra.mxu0 %v71
    %128 = vmatprep.subr.bf16.mxu0 0
    %129 = vmatpush1.bf16.msra.mxu0 %v72
    %130 = vmatprep.subr.bf16.mxu0 0
    %131 = vmatpush1.bf16.msra.mxu0 0
    %132 = vmatprep.subr.bf16.mxu0 0
    %133 = vmatpush1.bf16.msra.mxu0 0
    %134 = vmatprep.subr.bf16.mxu0 0
    %135 = vmatpush1.bf16.msra.mxu0 0
    %136 = vmatprep.subr.bf16.mxu0 0
    %137 = vmatpush1.bf16.msra.mxu0 0
    %138 = vmatprep.subr.bf16.mxu0 0
    %139 = vmatpush1.bf16.msra.mxu0 0
    %140 = vmatprep.subr.bf16.mxu0 0
    %141 = vmatpush1.bf16.msra.mxu0 0
    %142 = vmatprep.subr.bf16.mxu0 0
    %143 = vmatpush1.bf16.msra.mxu0 0
    %144 = vmatprep.subr.bf16.mxu0 0
    %145 = vmatpush1.bf16.msra.mxu0 0
    %146 = vmatprep.subr.bf16.mxu0 0
    %147 = vmatpush1.bf16.msra.mxu0 0
    %148 = vmatprep.subr.bf16.mxu0 0
    %149 = vmatpush1.bf16.msra.mxu0 0
    %150 = vmatprep.subr.bf16.mxu0 0
    %151 = vmatpush1.bf16.msra.mxu0 0
    %152 = vmatprep.subr.bf16.mxu0 0
    %153 = vmatpush1.bf16.msra.mxu0 0
    %154 = vmatprep.mubr.bf16.mxu0 0
    %155 = vmatmul.mubr.bf16.gmra.mrb[0].mxu0 %v75
    %v156 = vpop.f32.mrb[0].mxu0
    %v157 = vadd.f32 0.0, %v156
    %v158 = vpop.f32.mrb[0].mxu0
    %v159 = vpop.f32.mrb[0].mxu0
    %v160 = vadd.f32 0.0, %v159
    %v161 = vpop.f32.mrb[0].mxu0
    %162 = vmatprep.mubr.bf16.mxu0 0
    %163 = vmatmul.mubr.bf16.gmra.mrb[0].mxu0 %v78
    %v164 = vpop.f32.mrb[0].mxu0
    %v165 = vadd.f32 0.0, %v164
    %v166 = vpop.f32.mrb[0].mxu0
    %v167 = vpop.f32.mrb[0].mxu0
    %v168 = vadd.f32 0.0, %v167
    %v169 = vpop.f32.mrb[0].mxu0
    %170 = vmatprep.mubr.bf16.mxu0 0
    %171 = vmatmul.mubr.bf16.gmra.mrb[0].mxu0 %v81
    %v172 = vpop.f32.mrb[0].mxu0
    %v173 = vadd.f32 0.0, %v172
    %v174 = vpop.f32.mrb[0].mxu0
    %v175 = vpop.f32.mrb[0].mxu0
    %v176 = vadd.f32 0.0, %v175
    %v177 = vpop.f32.mrb[0].mxu0
    %178 = vmatprep.mubr.bf16.mxu0 0
    %179 = vmatmul.mubr.bf16.gmra.mrb[0].mxu0 %v84
    %v180 = vpop.f32.mrb[0].mxu0
    %v181 = vadd.f32 0.0, %v180
    %v182 = vpop.f32.mrb[0].mxu0
    %v183 = vpop.f32.mrb[0].mxu0
    %v184 = vadd.f32 0.0, %v183
    %v185 = vpop.f32.mrb[0].mxu0
    %186 = vmatprep.mubr.bf16.mxu0 0
    %187 = vmatmul.mubr.bf16.gmra.mrb[0].mxu0 %v87
    %v188 = vpop.f32.mrb[0].mxu0
    %v189 = vadd.f32 0.0, %v188
    %v190 = vpop.f32.mrb[0].mxu0
    %v191 = vpop.f32.mrb[0].mxu0
    %v192 = vadd.f32 0.0, %v191
    %v193 = vpop.f32.mrb[0].mxu0
    %194 = vmatprep.mubr.bf16.mxu0 0
    %195 = vmatmul.mubr.bf16.gmra.mrb[0].mxu0 %v90
    %v196 = vpop.f32.mrb[0].mxu0
    %v197 = vadd.f32 0.0, %v196
    %v198 = vpop.f32.mrb[0].mxu0
    %v199 = vpop.f32.mrb[0].mxu0
    %v200 = vadd.f32 0.0, %v199
    %v201 = vpop.f32.mrb[0].mxu0
    %202 = vmatprep.mubr.bf16.mxu0 0
    %203 = vmatmul.mubr.bf16.gmra.mrb[0].mxu0 %v93
    %v204 = vpop.f32.mrb[0].mxu0
    %v205 = vadd.f32 0.0, %v204
    %v206 = vpop.f32.mrb[0].mxu0
    %v207 = vpop.f32.mrb[0].mxu0
    %v208 = vadd.f32 0.0, %v207
    %v209 = vpop.f32.mrb[0].mxu0
    %210 = vmatprep.mubr.bf16.mxu0 0
    %211 = vmatmul.mubr.bf16.gmra.mrb[0].mxu0 %v96
    %v212 = vpop.f32.mrb[0].mxu0
    %v213 = vadd.f32 0.0, %v212
    %v214 = vpop.f32.mrb[0].mxu0
    %v215 = vpop.f32.mrb[0].mxu0
    %v216 = vadd.f32 0.0, %v215
    %v217 = vpop.f32.mrb[0].mxu0
    %218 = vmatprep.mubr.bf16.mxu0 0
    %219 = vmatmul.mubr.bf16.gmra.mrb[0].mxu0 %v99
    %v220 = vpop.f32.mrb[0].mxu0
    %v221 = vadd.f32 0.0, %v220
    %v222 = vpop.f32.mrb[0].mxu0
    %v223 = vpop.f32.mrb[0].mxu0
    %v224 = vadd.f32 0.0, %v223
    %v225 = vpop.f32.mrb[0].mxu0
    %226 = vmatprep.mubr.bf16.mxu0 0
    %227 = vmatmul.mubr.bf16.gmra.mrb[0].mxu0 %v102
    %v228 = vpop.f32.mrb[0].mxu0
    %v229 = vadd.f32 0.0, %v228
    %v230 = vpop.f32.mrb[0].mxu0
    %v231 = vpop.f32.mrb[0].mxu0
    %v232 = vadd.f32 0.0, %v231
    %v233 = vpop.f32.mrb[0].mxu0
    %234 = vmatprep.mubr.bf16.mxu0 0
    %235 = vmatmul.mubr.bf16.gmra.mrb[0].mxu0 %v105
    %v236 = vpop.f32.mrb[0].mxu0
    %v237 = vadd.f32 0.0, %v236
    %v238 = vpop.f32.mrb[0].mxu0
    %v239 = vpop.f32.mrb[0].mxu0
    %v240 = vadd.f32 0.0, %v239
    %v241 = vpop.f32.mrb[0].mxu0
    %242 = vmatprep.mubr.bf16.mxu0 0
    %243 = vmatmul.mubr.bf16.gmra.mrb[0].mxu0 %v108
    %v244 = vpop.f32.mrb[0].mxu0
    %v245 = vadd.f32 0.0, %v244
    %v246 = vpop.f32.mrb[0].mxu0
    %v247 = vpop.f32.mrb[0].mxu0
    %v248 = vadd.f32 0.0, %v247
    %v249 = vpop.f32.mrb[0].mxu0
    %250 = vmatprep.mubr.bf16.mxu0 0
    %251 = vmatmul.mubr.bf16.gmra.mrb[0].mxu0 %v111
    %v252 = vpop.f32.mrb[0].mxu0
    %v253 = vadd.f32 0.0, %v252
    %v254 = vpop.f32.mrb[0].mxu0
    %v255 = vpop.f32.mrb[0].mxu0
    %v256 = vadd.f32 0.0, %v255
    %v257 = vpop.f32.mrb[0].mxu0
    %258 = vmatprep.mubr.bf16.mxu0 0
    %259 = vmatmul.mubr.bf16.gmra.mrb[0].mxu0 %v114
    %v260 = vpop.f32.mrb[0].mxu0
    %v261 = vadd.f32 0.0, %v260
    %v262 = vpop.f32.mrb[0].mxu0
    %v263 = vpop.f32.mrb[0].mxu0
    %v264 = vadd.f32 0.0, %v263
    %v265 = vpop.f32.mrb[0].mxu0
    %266 = vmatprep.mubr.bf16.mxu0 0
    %267 = vmatmul.mubr.bf16.gmra.mrb[0].mxu0 %v117
    %v268 = vpop.f32.mrb[0].mxu0
    %v269 = vadd.f32 0.0, %v268
    %v270 = vpop.f32.mrb[0].mxu0
    %v271 = vpop.f32.mrb[0].mxu0
    %v272 = vadd.f32 0.0, %v271
    %v273 = vpop.f32.mrb[0].mxu0
    %274 = vmatprep.mubr.bf16.mxu0 0
    %275 = vmatmul.mubr.bf16.gmra.mrb[0].mxu0 %v120
    %v276 = vpop.f32.mrb[0].mxu0
    %v277 = vadd.f32 0.0, %v276
    %v278 = vpop.f32.mrb[0].mxu0
    %v279 = vpop.f32.mrb[0].mxu0
    %v280 = vadd.f32 0.0, %v279
    %v281 = vpop.f32.mrb[0].mxu0
    %282 = vdwg.mxu0
    %v283 = vpack.c.bf16 %v160, %v157
    %v284 = vpack.c.bf16 %v168, %v165
    %v285 = vpack.c.bf16 %v176, %v173
    %v286 = vpack.c.bf16 %v184, %v181
    %v287 = vpack.c.bf16 %v192, %v189
    %v288 = vpack.c.bf16 %v200, %v197
    %v289 = vpack.c.bf16 %v208, %v205
    %v290 = vpack.c.bf16 %v216, %v213
    %v291 = vpack.c.bf16 %v224, %v221
    %v292 = vpack.c.bf16 %v232, %v229
    %v293 = vpack.c.bf16 %v240, %v237
    %v294 = vpack.c.bf16 %v248, %v245
    %v295 = vpack.c.bf16 %v256, %v253
    %v296 = vpack.c.bf16 %v264, %v261
    %v297 = vpack.c.bf16 %v272, %v269
    %v298 = vpack.c.bf16 %v280, %v277
    %v315 = vunpack.c.l.b16 %v283
    %v316 = vunpack.c.h.b16 %v283
    %v317 = vunpack.c.l.b16 %v284
    %v318 = vunpack.c.h.b16 %v284
    %v319 = vunpack.c.l.b16 %v285
    %v320 = vunpack.c.h.b16 %v285
    %v321 = vunpack.c.l.b16 %v286
    %v322 = vunpack.c.h.b16 %v286
    %v323 = vunpack.c.l.b16 %v287
    %v324 = vunpack.c.h.b16 %v287
    %v325 = vunpack.c.l.b16 %v288
    %v326 = vunpack.c.h.b16 %v288
    %v327 = vunpack.c.l.b16 %v289
    %v328 = vunpack.c.h.b16 %v289
    %v329 = vunpack.c.l.b16 %v290
    %v330 = vunpack.c.h.b16 %v290
    %v331 = vunpack.c.l.b16 %v291
    %v332 = vunpack.c.h.b16 %v291
    %v333 = vunpack.c.l.b16 %v292
    %v334 = vunpack.c.h.b16 %v292
    %v335 = vunpack.c.l.b16 %v293
    %v336 = vunpack.c.h.b16 %v293
    %v337 = vunpack.c.l.b16 %v294
    %v338 = vunpack.c.h.b16 %v294
    %v339 = vunpack.c.l.b16 %v295
    %v340 = vunpack.c.h.b16 %v295
    %v341 = vunpack.c.l.b16 %v296
    %v342 = vunpack.c.h.b16 %v296
    %v343 = vunpack.c.l.b16 %v297
    %v344 = vunpack.c.h.b16 %v297
    %v345 = vunpack.c.l.b16 %v298
    %v346 = vunpack.c.h.b16 %v298
    %v347 = vpack.c.b16 %v315, %v315
    %v348 = vpack.c.b16 %v316, %v316
    %v349 = vpack.c.b16 %v317, %v317
    %v350 = vpack.c.b16 %v318, %v318
    %v351 = vpack.c.b16 %v319, %v319
    %v352 = vpack.c.b16 %v320, %v320
    %v353 = vpack.c.b16 %v321, %v321
    %v354 = vpack.c.b16 %v322, %v322
    %v355 = vpack.c.b16 %v323, %v323
    %v356 = vpack.c.b16 %v324, %v324
    %v357 = vpack.c.b16 %v325, %v325
    %v358 = vpack.c.b16 %v326, %v326
    %v359 = vpack.c.b16 %v327, %v327
    %v360 = vpack.c.b16 %v328, %v328
    %v361 = vpack.c.b16 %v329, %v329
    %v362 = vpack.c.b16 %v330, %v330
    %v363 = vpack.c.b16 %v331, %v331
    %v364 = vpack.c.b16 %v332, %v332
    %v365 = vpack.c.b16 %v333, %v333
    %v366 = vpack.c.b16 %v334, %v334
    %v367 = vpack.c.b16 %v335, %v335
    %v368 = vpack.c.b16 %v336, %v336
    %v369 = vpack.c.b16 %v337, %v337
    %v370 = vpack.c.b16 %v338, %v338
    %v371 = vpack.c.b16 %v339, %v339
    %v372 = vpack.c.b16 %v340, %v340
    %v373 = vpack.c.b16 %v341, %v341
    %v374 = vpack.c.b16 %v342, %v342
    %v375 = vpack.c.b16 %v343, %v343
    %v376 = vpack.c.b16 %v344, %v344
    %v377 = vpack.c.b16 %v345, %v345
    %v378 = vpack.c.b16 %v346, %v346
    %411 = vst [vmem:[#allocation2] sm:$0xf] %v347
    %412 = vst [vmem:[#allocation2 + $0x4] sm:$0xf] %v348
    %413 = vst [vmem:[#allocation2 + $0x8] sm:$0xf] %v349
    %414 = vst [vmem:[#allocation2 + $0xc] sm:$0xf] %v350
    %415 = vst [vmem:[#allocation2 + $0x10] sm:$0xf] %v351
    %416 = vst [vmem:[#allocation2 + $0x14] sm:$0xf] %v352
    %417 = vst [vmem:[#allocation2 + $0x18] sm:$0xf] %v353
    %418 = vst [vmem:[#allocation2 + $0x1c] sm:$0xf] %v354
    %419 = vst [vmem:[#allocation2 + $0x20] sm:$0xf] %v355
    %420 = vst [vmem:[#allocation2 + $0x24] sm:$0xf] %v356
    %421 = vst [vmem:[#allocation2 + $0x28] sm:$0xf] %v357
    %422 = vst [vmem:[#allocation2 + $0x2c] sm:$0xf] %v358
    %423 = vst [vmem:[#allocation2 + $0x30] sm:$0xf] %v359
    %424 = vst [vmem:[#allocation2 + $0x34] sm:$0xf] %v360
    %425 = vst [vmem:[#allocation2 + $0x38] sm:$0xf] %v361
    %426 = vst [vmem:[#allocation2 + $0x3c] sm:$0xf] %v362
    %427 = vst [vmem:[#allocation2 + $0x40] sm:$0xf] %v363
    %428 = vst [vmem:[#allocation2 + $0x44] sm:$0xf] %v364
    %429 = vst [vmem:[#allocation2 + $0x48] sm:$0xf] %v365
    %430 = vst [vmem:[#allocation2 + $0x4c] sm:$0xf] %v366
    %431 = vst [vmem:[#allocation2 + $0x50] sm:$0xf] %v367
    %432 = vst [vmem:[#allocation2 + $0x54] sm:$0xf] %v368
    %433 = vst [vmem:[#allocation2 + $0x58] sm:$0xf] %v369
    %434 = vst [vmem:[#allocation2 + $0x5c] sm:$0xf] %v370
    %435 = vst [vmem:[#allocation2 + $0x60] sm:$0xf] %v371
    %436 = vst [vmem:[#allocation2 + $0x64] sm:$0xf] %v372
    %437 = vst [vmem:[#allocation2 + $0x68] sm:$0xf] %v373
    %438 = vst [vmem:[#allocation2 + $0x6c] sm:$0xf] %v374
    %439 = vst [vmem:[#allocation2 + $0x70] sm:$0xf] %v375
    %440 = vst [vmem:[#allocation2 + $0x74] sm:$0xf] %v376
    %441 = vst [vmem:[#allocation2 + $0x78] sm:$0xf] %v377
    %442 = vst [vmem:[#allocation2 + $0x7c] sm:$0xf] %v378
    // Predicated region
    $region10: #{tpu_custom_call.1} parent=1 // pred_check
      _
    $region11: #{tpu_custom_call.1} parent=1 // pred_check_branch
      %444 = sbr.rel (0) target = $region13
    $region12: #{tpu_custom_call.1} parent=1 // pred_region
      %s446 = ssub.s32 2048, 2048
      %447 = vsyncadd [#allocation3], %s446
      %s448 = sshll.u32 [#allocation2], 4
      %s449 = int_to_ptr.vmem [resolvable:$true] %s448
      %454 = dma.vmem_to_hbm [thread:$0]  %s449, 2048, %s2, [#allocation3], 64, 64, 4
    $region13: #{tpu_custom_call.1} parent=1 // pred_fallthru
      _
    // Predicated region
    $region14: #{tpu_custom_call.1} parent=1 // pred_check
      _
    $region15: #{tpu_custom_call.1} parent=1 // pred_check_branch
      %456 = sbr.rel (0) target = $region17
    $region16: #{tpu_custom_call.1} parent=1 // pred_region
      %457 = dma.done [#allocation3], 2048
    $region17: #{tpu_custom_call.1} parent=1 // pred_fallthru
      _
    %458 = vsyncpa [#allocation3], 1

</llo_original>
